<compile_context>
chip_gen: v5e
topology: v5e:2x2
jax: 0.10.0
libtpu: 0.0.40
codegen_flags: <defaults>
</compile_context>

<pallas_src>
import jax
import jax.numpy as jnp
from jax.experimental import pallas as pl
from jax.experimental.pallas import tpu as pltpu

D_IN, D_H1, D_H2, D_OUT = 900, 256, 64, 4
D_IN_PAD = 1024    # 900 -> next multiple of 128 (clean lane layout / MXU K)
D_OUT_PAD = 128    # 4   -> lane-dense output (unmasked vst)


def dqn_kernel(x_ref, w1_ref, b1_ref, w2_ref, b2_ref, w3_ref, b3_ref, o_ref):
    # fc1 + relu  (bf16 operands, f32 accumulate on the MXU)
    h1 = jnp.dot(x_ref[...], w1_ref[...], preferred_element_type=jnp.float32)
    h1 = jnp.maximum(h1 + b1_ref[...], 0.0)
    # fc2 + relu
    h2 = jnp.dot(h1.astype(w2_ref.dtype), w2_ref[...],
                 preferred_element_type=jnp.float32)
    h2 = jnp.maximum(h2 + b2_ref[...], 0.0)
    # fc3 (no activation); output is 128 lanes wide, columns >= 4 are zero padding.
    out = jnp.dot(h2.astype(w3_ref.dtype), w3_ref[...],
                  preferred_element_type=jnp.float32)
    o_ref[...] = (out + b3_ref[...]).astype(o_ref.dtype)


def dqn_forward(x, params, *, tb=256):
    """x: (B, 900) float32. params: padded/bf16 params from prepare_params."""
    w1, b1, w2, b2, w3, b3 = params
    B = x.shape[0]

    # Batch tile: multiple of 8 (and of 16 for bf16 packing when >1 block),
    # capped at 256 to match v6e/v7x MXU height (also a multiple of v5e's 128).
    TB = min(tb, max(8, -(-B // 8) * 8))
    B_pad = -(-B // TB) * TB

    # Pad batch rows and the 900-feature dim; cast activations to bf16 for the MXU.
    x_pad = jnp.zeros((B_pad, D_IN_PAD), dtype=jnp.bfloat16)
    x_pad = x_pad.at[:B, :D_IN].set(x.astype(jnp.bfloat16))

    grid = (B_pad // TB,)

    def resident(shape):  # weights/biases: same block every grid step -> stay in VMEM
        return pl.BlockSpec(shape, lambda i: (0, 0))

    flops = 2 * B_pad * (D_IN_PAD * D_H1 + D_H1 * D_H2 + D_H2 * D_OUT_PAD)
    bytes_accessed = (
        x_pad.size * 2
        + sum(int(p.size) * p.dtype.itemsize for p in params)
        + B_pad * D_OUT_PAD * 4
    )

    out = pl.pallas_call(
        dqn_kernel,
        out_shape=jax.ShapeDtypeStruct((B_pad, D_OUT_PAD), jnp.float32),
        grid=grid,
        in_specs=[
            pl.BlockSpec((TB, D_IN_PAD), lambda i: (i, 0)),   # x tile (pipelined)
            resident((D_IN_PAD, D_H1)),                       # w1
            resident((1, D_H1)),                              # b1
            resident((D_H1, D_H2)),                           # w2
            resident((1, D_H2)),                              # b2
            resident((D_H2, D_OUT_PAD)),                      # w3 (lane-padded)
            resident((1, D_OUT_PAD)),                         # b3 (lane-padded)
        ],
        out_specs=pl.BlockSpec((TB, D_OUT_PAD), lambda i: (i, 0)),
        compiler_params=pltpu.CompilerParams(
            dimension_semantics=("parallel",),    # 2 TCs on v7x; no-op on v5e/v6e
            vmem_limit_bytes=32 << 20,
        ),
        cost_estimate=pl.CostEstimate(
            flops=flops, transcendentals=0, bytes_accessed=bytes_accessed),
    )(x_pad, w1, b1, w2, b2, w3, b3)

    return out[:B, :D_OUT]


def init_params(key):
    """f32 params mimicking PyTorch nn.Linear default init, stored as (in, out)."""
    dims = [(D_IN, D_H1), (D_H1, D_H2), (D_H2, D_OUT)]
    params = []
    keys = jax.random.split(key, 2 * len(dims))
    for i, (fan_in, fan_out) in enumerate(dims):
        bound = 1.0 / (fan_in ** 0.5)
        w = jax.random.uniform(keys[2 * i], (fan_in, fan_out),
                               minval=-bound, maxval=bound, dtype=jnp.float32)
        b = jax.random.uniform(keys[2 * i + 1], (1, fan_out),
                               minval=-bound, maxval=bound, dtype=jnp.float32)
        params.extend([w, b])
    return tuple(params)


def prepare_params(params_f32):
    """Pad K (900->1024) / N (4->128) with zeros and cast weights to bf16."""
    w1, b1, w2, b2, w3, b3 = params_f32
    w1p = jnp.zeros((D_IN_PAD, D_H1), jnp.bfloat16).at[:D_IN, :].set(
        w1.astype(jnp.bfloat16))
    w2p = w2.astype(jnp.bfloat16)
    w3p = jnp.zeros((D_H2, D_OUT_PAD), jnp.bfloat16).at[:, :D_OUT].set(
        w3.astype(jnp.bfloat16))
    b3p = jnp.zeros((1, D_OUT_PAD), jnp.float32).at[:, :D_OUT].set(b3)
    return (w1p, b1.astype(jnp.float32), w2p, b2.astype(jnp.float32), w3p, b3p)


if __name__ == "__main__":
    key = jax.random.PRNGKey(0)
    k_x, k_p = jax.random.split(key)
    batch = 2
    x = jax.random.normal(k_x, (batch, D_IN), dtype=jnp.float32)

    params_f32 = init_params(k_p)
    params = prepare_params(params_f32)

    fwd = jax.jit(dqn_forward)
    out = jax.block_until_ready(fwd(x, params))
    assert out.shape == (batch, D_OUT)

    # Reference 1: same bf16/f32-accumulate math in plain JAX (tight check,
    # also validates the K/N zero-padding logic since it uses unpadded arrays).
    w1, b1, w2, b2, w3, b3 = params_f32
    to_bf = lambda a: a.astype(jnp.bfloat16)
    h = jnp.maximum(jnp.dot(to_bf(x), to_bf(w1),
                            preferred_element_type=jnp.float32) + b1, 0.0)
    h = jnp.maximum(jnp.dot(to_bf(h), to_bf(w2),
                            preferred_element_type=jnp.float32) + b2, 0.0)
    ref_bf16 = jnp.dot(to_bf(h), to_bf(w3),
                       preferred_element_type=jnp.float32) + b3
    assert jnp.allclose(out, ref_bf16, atol=1e-2, rtol=1e-2)

    # Reference 2: full f32 math (matches the PyTorch module); loose tolerance
    # accounts for bf16 weights/activations.
    ref_f32 = jnp.maximum(x @ w1 + b1, 0.0)
    ref_f32 = jnp.maximum(ref_f32 @ w2 + b2, 0.0)
    ref_f32 = ref_f32 @ w3 + b3
    assert jnp.allclose(out, ref_f32, atol=5e-2, rtol=5e-2)

    print("KERNEL_OK")
</pallas_src>

<mosaic_0001>
module attributes {stable_mosaic.version = 11 : i64} {
  func.func @dqn_kernel(%arg0: i32, %arg1: memref<8x1024xbf16, #tpu.memory_space<vmem>>, %arg2: memref<1024x256xbf16, #tpu.memory_space<vmem>>, %arg3: memref<1x256xf32, #tpu.memory_space<vmem>>, %arg4: memref<256x64xbf16, #tpu.memory_space<vmem>>, %arg5: memref<1x64xf32, #tpu.memory_space<vmem>>, %arg6: memref<64x128xbf16, #tpu.memory_space<vmem>>, %arg7: memref<1x128xf32, #tpu.memory_space<vmem>>, %arg8: memref<8x128xf32, #tpu.memory_space<vmem>>) attributes {dimension_semantics = [#tpu.dimension_semantics<parallel>], iteration_bounds = array<i64: 1>, scalar_prefetch = 0 : i64, scratch_operands = 0 : i64, tpu.core_type = #tpu.core_type<tc>, window_params = [{transform_indices = @transform_0, window_bounds = array<i64: 8, 1024>}, {pipeline_mode = #tpu.pipeline_mode<synchronous>, transform_indices = @transform_1, window_bounds = array<i64: 1024, 256>}, {pipeline_mode = #tpu.pipeline_mode<synchronous>, transform_indices = @transform_2, window_bounds = array<i64: 1, 256>}, {pipeline_mode = #tpu.pipeline_mode<synchronous>, transform_indices = @transform_3, window_bounds = array<i64: 256, 64>}, {pipeline_mode = #tpu.pipeline_mode<synchronous>, transform_indices = @transform_4, window_bounds = array<i64: 1, 64>}, {pipeline_mode = #tpu.pipeline_mode<synchronous>, transform_indices = @transform_5, window_bounds = array<i64: 64, 128>}, {pipeline_mode = #tpu.pipeline_mode<synchronous>, transform_indices = @transform_6, window_bounds = array<i64: 1, 128>}, {transform_indices = @transform_7, window_bounds = array<i64: 8, 128>}]} {
    %c0 = arith.constant 0 : index
    %c0_0 = arith.constant 0 : index
    %0 = vector.load %arg1[%c0, %c0_0] : memref<8x1024xbf16, #tpu.memory_space<vmem>>, vector<8x1024xbf16>
    %c0_1 = arith.constant 0 : index
    %c0_2 = arith.constant 0 : index
    %1 = vector.load %arg2[%c0_1, %c0_2] : memref<1024x256xbf16, #tpu.memory_space<vmem>>, vector<1024x256xbf16>
    %cst = arith.constant dense<0.000000e+00> : vector<8x256xf32>
    %2 = tpu.matmul %0, %1, %cst {dimension_numbers = #tpu.dot_dimension_numbers<[1], [0], [0], [1], [0, 0, 1, 1], [], []>} : vector<8x1024xbf16>, vector<1024x256xbf16>, vector<8x256xf32> -> vector<8x256xf32>
    %c0_3 = arith.constant 0 : index
    %c0_4 = arith.constant 0 : index
    %3 = vector.load %arg3[%c0_3, %c0_4] : memref<1x256xf32, #tpu.memory_space<vmem>>, vector<1x256xf32>
    %4 = vector.broadcast %3 : vector<1x256xf32> to vector<8x256xf32>
    %5 = arith.addf %2, %4 : vector<8x256xf32>
    %cst_5 = arith.constant 0.000000e+00 : f32
    %6 = vector.broadcast %cst_5 : f32 to vector<8x256xf32>
    %7 = arith.maximumf %5, %6 : vector<8x256xf32>
    %8 = arith.truncf %7 : vector<8x256xf32> to vector<8x256xbf16>
    %c0_6 = arith.constant 0 : index
    %c0_7 = arith.constant 0 : index
    %9 = vector.load %arg4[%c0_6, %c0_7] : memref<256x64xbf16, #tpu.memory_space<vmem>>, vector<256x64xbf16>
    %cst_8 = arith.constant dense<0.000000e+00> : vector<8x64xf32>
    %10 = tpu.matmul %8, %9, %cst_8 {dimension_numbers = #tpu.dot_dimension_numbers<[1], [0], [0], [1], [0, 0, 1, 1], [], []>} : vector<8x256xbf16>, vector<256x64xbf16>, vector<8x64xf32> -> vector<8x64xf32>
    %c0_9 = arith.constant 0 : index
    %c0_10 = arith.constant 0 : index
    %11 = vector.load %arg5[%c0_9, %c0_10] : memref<1x64xf32, #tpu.memory_space<vmem>>, vector<1x64xf32>
    %12 = vector.broadcast %11 : vector<1x64xf32> to vector<8x64xf32>
    %13 = arith.addf %10, %12 : vector<8x64xf32>
    %cst_11 = arith.constant 0.000000e+00 : f32
    %14 = vector.broadcast %cst_11 : f32 to vector<8x64xf32>
    %15 = arith.maximumf %13, %14 : vector<8x64xf32>
    %16 = arith.truncf %15 : vector<8x64xf32> to vector<8x64xbf16>
    %c0_12 = arith.constant 0 : index
    %c0_13 = arith.constant 0 : index
    %17 = vector.load %arg6[%c0_12, %c0_13] : memref<64x128xbf16, #tpu.memory_space<vmem>>, vector<64x128xbf16>
    %cst_14 = arith.constant dense<0.000000e+00> : vector<8x128xf32>
    %18 = tpu.matmul %16, %17, %cst_14 {dimension_numbers = #tpu.dot_dimension_numbers<[1], [0], [0], [1], [0, 0, 1, 1], [], []>} : vector<8x64xbf16>, vector<64x128xbf16>, vector<8x128xf32> -> vector<8x128xf32>
    %c0_15 = arith.constant 0 : index
    %c0_16 = arith.constant 0 : index
    %19 = vector.load %arg7[%c0_15, %c0_16] : memref<1x128xf32, #tpu.memory_space<vmem>>, vector<1x128xf32>
    %20 = vector.broadcast %19 : vector<1x128xf32> to vector<8x128xf32>
    %21 = arith.addf %18, %20 : vector<8x128xf32>
    %c0_17 = arith.constant 0 : index
    %c0_18 = arith.constant 0 : index
    %22 = vector.load %arg8[%c0_17, %c0_18] : memref<8x128xf32, #tpu.memory_space<vmem>>, vector<8x128xf32>
    tpu.vector_store %arg8[%c0_17, %c0_18], %21 {strides = array<i32>} : memref<8x128xf32, #tpu.memory_space<vmem>>, vector<8x128xf32>,
    return
  }
  func.func @transform_0(%arg0: i32) -> (i32, i32) {
    %c0_i32 = arith.constant 0 : i32
    %c0_i32_0 = arith.constant 0 : i32
    return %arg0, %c0_i32 : i32, i32
  }
  func.func @transform_1(%arg0: i32) -> (i32, i32) {
    %c0_i32 = arith.constant 0 : i32
    %c0_i32_0 = arith.constant 0 : i32
    %c0_i32_1 = arith.constant 0 : i32
    return %c0_i32, %c0_i32_0 : i32, i32
  }
  func.func @transform_2(%arg0: i32) -> (i32, i32) {
    %c0_i32 = arith.constant 0 : i32
    %c0_i32_0 = arith.constant 0 : i32
    %c0_i32_1 = arith.constant 0 : i32
    return %c0_i32, %c0_i32_0 : i32, i32
  }
  func.func @transform_3(%arg0: i32) -> (i32, i32) {
    %c0_i32 = arith.constant 0 : i32
    %c0_i32_0 = arith.constant 0 : i32
    %c0_i32_1 = arith.constant 0 : i32
    return %c0_i32, %c0_i32_0 : i32, i32
  }
  func.func @transform_4(%arg0: i32) -> (i32, i32) {
    %c0_i32 = arith.constant 0 : i32
    %c0_i32_0 = arith.constant 0 : i32
    %c0_i32_1 = arith.constant 0 : i32
    return %c0_i32, %c0_i32_0 : i32, i32
  }
  func.func @transform_5(%arg0: i32) -> (i32, i32) {
    %c0_i32 = arith.constant 0 : i32
    %c0_i32_0 = arith.constant 0 : i32
    %c0_i32_1 = arith.constant 0 : i32
    return %c0_i32, %c0_i32_0 : i32, i32
  }
  func.func @transform_6(%arg0: i32) -> (i32, i32) {
    %c0_i32 = arith.constant 0 : i32
    %c0_i32_0 = arith.constant 0 : i32
    %c0_i32_1 = arith.constant 0 : i32
    return %c0_i32, %c0_i32_0 : i32, i32
  }
  func.func @transform_7(%arg0: i32) -> (i32, i32) {
    %c0_i32 = arith.constant 0 : i32
    %c0_i32_0 = arith.constant 0 : i32
    return %arg0, %c0_i32 : i32, i32
  }
}

</mosaic_0001>

<llo_original>
// kernel: dqn_forward.1
$region0: #{dqn_forward.1}
  #allocation0 [shape = 'u32[]', space=smem, size = 0x4, offset = 0x4, fixed_abs, tag = 'smem constant byte address 0x4 - core index']
  #allocation1 [shape = 'u32[72,128]{1,0:T(1,128)}', space=vmem, size = 0x9000, scoped, tag = 'internal scratch']
  %s0 = inlined_call_operand.vmem [shape: bf16[8,1024], index: 0, kind: input, shape index: {}]
  %s1 = inlined_call_operand.hbm [shape: bf16[1024,256], index: 1, kind: input, shape index: {}]
  %s2 = inlined_call_operand.vmem [shape: f32[1,256], index: 2, kind: input, shape index: {}]
  %s3 = inlined_call_operand.vmem [shape: bf16[256,64], index: 3, kind: input, shape index: {}]
  %s4 = inlined_call_operand.vmem [shape: f32[1,64], index: 4, kind: input, shape index: {}]
  %s5 = inlined_call_operand.vmem [shape: bf16[64,128], index: 5, kind: input, shape index: {}]
  %s6 = inlined_call_operand.vmem [shape: f32[1,128], index: 6, kind: input, shape index: {}]
  %s7 = inlined_call_operand.vmem [shape: f32[8,128], index: 7, kind: output, shape index: {}]
  %s8 = sld [smem:[#allocation0]]
  $region42: #{dqn_forward.1} parent=0
    _
  %s10 = ssub.s32 1, %s8
  %s11 = scalar_select 0, %s10, %s8
  $region1: #{dqn_forward.1} parent=0
    #allocation2 [shape = 'u8[524288]{0}', space=vmem, size = 0x80000, scoped, tag = 'input window, operand 1, single buffered']
    #allocation3 [shape = 's32[1]{0}', space=sflag, size = 0x4, scoped, tag = 'scoped memory for dqn_forward.1']
    %12 = vsyncpa [#allocation3], 0
    // Predicated region
    $region2: #{dqn_forward.1} parent=1 // pred_check
      _
    $region3: #{dqn_forward.1} parent=1 // pred_check_branch
      %14 = sbr.rel (0) target = $region5
    $region4: #{dqn_forward.1} parent=1 // pred_region
      _
    $region5: #{dqn_forward.1} parent=1 // pred_fallthru
      _
    // Predicated region
    $region6: #{dqn_forward.1} parent=1 // pred_check
      _
    $region7: #{dqn_forward.1} parent=1 // pred_check_branch
      %16 = sbr.rel (0) target = $region9
    $region8: #{dqn_forward.1} parent=1 // pred_region
      %18 = vsyncadd [#allocation3], 0
      %s19 = sshll.u32 %s1, 4
      %s20 = int_to_ptr.hbm [resolvable:$true] %s19
      %s21 = sshll.u32 [#allocation2], 4
      %s22 = int_to_ptr.vmem [resolvable:$true] %s21
      %27 = dma.hbm_to_vmem [thread:$0]  %s20, 16384, %s22, [#allocation3], 128, 128, 8
    $region9: #{dqn_forward.1} parent=1 // pred_fallthru
      _
    // Predicated region
    $region10: #{dqn_forward.1} parent=1 // pred_check
      _
    $region11: #{dqn_forward.1} parent=1 // pred_check_branch
      %29 = sbr.rel (0) target = $region13
    $region12: #{dqn_forward.1} parent=1 // pred_region
      _
    $region13: #{dqn_forward.1} parent=1 // pred_fallthru
      _
    // Predicated region
    $region14: #{dqn_forward.1} parent=1 // pred_check
      _
    $region15: #{dqn_forward.1} parent=1 // pred_check_branch
      %31 = sbr.rel (0) target = $region17
    $region16: #{dqn_forward.1} parent=1 // pred_region
      _
    $region17: #{dqn_forward.1} parent=1 // pred_fallthru
      _
    // Predicated region
    $region18: #{dqn_forward.1} parent=1 // pred_check
      _
    $region19: #{dqn_forward.1} parent=1 // pred_check_branch
      %33 = sbr.rel (0) target = $region21
    $region20: #{dqn_forward.1} parent=1 // pred_region
      _
    $region21: #{dqn_forward.1} parent=1 // pred_fallthru
      _
    // Predicated region
    $region22: #{dqn_forward.1} parent=1 // pred_check
      _
    $region23: #{dqn_forward.1} parent=1 // pred_check_branch
      %35 = sbr.rel (0) target = $region25
    $region24: #{dqn_forward.1} parent=1 // pred_region
      _
    $region25: #{dqn_forward.1} parent=1 // pred_fallthru
      _
    // Predicated region
    $region26: #{dqn_forward.1} parent=1 // pred_check
      _
    $region27: #{dqn_forward.1} parent=1 // pred_check_branch
      %37 = sbr.rel (0) target = $region29
    $region28: #{dqn_forward.1} parent=1 // pred_region
      _
    $region29: #{dqn_forward.1} parent=1 // pred_fallthru
      _
    // Predicated region
    $region30: #{dqn_forward.1} parent=1 // pred_check
      _
    $region31: #{dqn_forward.1} parent=1 // pred_check_branch
      %39 = sbr.rel (0) target = $region33
    $region32: #{dqn_forward.1} parent=1 // pred_region
      %41 = dma.done [#allocation3], 16384
    $region33: #{dqn_forward.1} parent=1 // pred_fallthru
      _
    %v43 = vld [vmem:[%s0] sm:$0xff]
    %v44 = vld [vmem:[%s0 + $0x8] sm:$0xff]
    %v45 = vld [vmem:[%s0 + $0x10] sm:$0xff]
    %v46 = vld [vmem:[%s0 + $0x18] sm:$0xff]
    %v47 = vld [vmem:[#allocation2] sm:$0xff]
    %v48 = vld [vmem:[#allocation2 + $0x8] sm:$0xff]
    %v49 = vld [vmem:[#allocation2 + $0x10] sm:$0xff]
    %v50 = vld [vmem:[#allocation2 + $0x18] sm:$0xff]
    %v51 = vld [vmem:[#allocation2 + $0x20] sm:$0xff]
    %v52 = vld [vmem:[#allocation2 + $0x28] sm:$0xff]
    %v53 = vld [vmem:[#allocation2 + $0x30] sm:$0xff]
    %v54 = vld [vmem:[#allocation2 + $0x38] sm:$0xff]
    %v55 = vld [vmem:[#allocation2 + $0x40] sm:$0xff]
    %v56 = vld [vmem:[#allocation2 + $0x48] sm:$0xff]
    %v57 = vld [vmem:[#allocation2 + $0x50] sm:$0xff]
    %v58 = vld [vmem:[#allocation2 + $0x58] sm:$0xff]
    %v59 = vld [vmem:[#allocation2 + $0x60] sm:$0xff]
    %v60 = vld [vmem:[#allocation2 + $0x68] sm:$0xff]
    %v61 = vld [vmem:[#allocation2 + $0x70] sm:$0xff]
    %v62 = vld [vmem:[#allocation2 + $0x78] sm:$0xff]
    %v63 = vld [vmem:[#allocation2 + $0x80] sm:$0xff]
    %v64 = vld [vmem:[#allocation2 + $0x88] sm:$0xff]
    %v65 = vld [vmem:[#allocation2 + $0x90] sm:$0xff]
    %v66 = vld [vmem:[#allocation2 + $0x98] sm:$0xff]
    %v67 = vld [vmem:[#allocation2 + $0xa0] sm:$0xff]
    %v68 = vld [vmem:[#allocation2 + $0xa8] sm:$0xff]
    %v69 = vld [vmem:[#allocation2 + $0xb0] sm:$0xff]
    %v70 = vld [vmem:[#allocation2 + $0xb8] sm:$0xff]
    %v71 = vld [vmem:[#allocation2 + $0xc0] sm:$0xff]
    %v72 = vld [vmem:[#allocation2 + $0xc8] sm:$0xff]
    %v73 = vld [vmem:[#allocation2 + $0xd0] sm:$0xff]
    %v74 = vld [vmem:[#allocation2 + $0xd8] sm:$0xff]
    %v75 = vld [vmem:[#allocation2 + $0xe0] sm:$0xff]
    %v76 = vld [vmem:[#allocation2 + $0xe8] sm:$0xff]
    %v77 = vld [vmem:[#allocation2 + $0xf0] sm:$0xff]
    %v78 = vld [vmem:[#allocation2 + $0xf8] sm:$0xff]
    %v79 = vld [vmem:[#allocation2 + $0x100] sm:$0xff]
    %v80 = vld [vmem:[#allocation2 + $0x108] sm:$0xff]
    %v81 = vld [vmem:[#allocation2 + $0x110] sm:$0xff]
    %v82 = vld [vmem:[#allocation2 + $0x118] sm:$0xff]
    %v83 = vld [vmem:[#allocation2 + $0x120] sm:$0xff]
    %v84 = vld [vmem:[#allocation2 + $0x128] sm:$0xff]
    %v85 = vld [vmem:[#allocation2 + $0x130] sm:$0xff]
    %v86 = vld [vmem:[#allocation2 + $0x138] sm:$0xff]
    %v87 = vld [vmem:[#allocation2 + $0x140] sm:$0xff]
    %v88 = vld [vmem:[#allocation2 + $0x148] sm:$0xff]
    %v89 = vld [vmem:[#allocation2 + $0x150] sm:$0xff]
    %v90 = vld [vmem:[#allocation2 + $0x158] sm:$0xff]
    %v91 = vld [vmem:[#allocation2 + $0x160] sm:$0xff]
    %v92 = vld [vmem:[#allocation2 + $0x168] sm:$0xff]
    %v93 = vld [vmem:[#allocation2 + $0x170] sm:$0xff]
    %v94 = vld [vmem:[#allocation2 + $0x178] sm:$0xff]
    %v95 = vld [vmem:[#allocation2 + $0x180] sm:$0xff]
    %v96 = vld [vmem:[#allocation2 + $0x188] sm:$0xff]
    %v97 = vld [vmem:[#allocation2 + $0x190] sm:$0xff]
    %v98 = vld [vmem:[#allocation2 + $0x198] sm:$0xff]
    %v99 = vld [vmem:[#allocation2 + $0x1a0] sm:$0xff]
    %v100 = vld [vmem:[#allocation2 + $0x1a8] sm:$0xff]
    %v101 = vld [vmem:[#allocation2 + $0x1b0] sm:$0xff]
    %v102 = vld [vmem:[#allocation2 + $0x1b8] sm:$0xff]
    %v103 = vld [vmem:[#allocation2 + $0x1c0] sm:$0xff]
    %v104 = vld [vmem:[#allocation2 + $0x1c8] sm:$0xff]
    %v105 = vld [vmem:[#allocation2 + $0x1d0] sm:$0xff]
    %v106 = vld [vmem:[#allocation2 + $0x1d8] sm:$0xff]
    %v107 = vld [vmem:[#allocation2 + $0x1e0] sm:$0xff]
    %v108 = vld [vmem:[#allocation2 + $0x1e8] sm:$0xff]
    %v109 = vld [vmem:[#allocation2 + $0x1f0] sm:$0xff]
    %v110 = vld [vmem:[#allocation2 + $0x1f8] sm:$0xff]
    %v111 = vld [vmem:[#allocation2 + $0x200] sm:$0xff]
    %v112 = vld [vmem:[#allocation2 + $0x208] sm:$0xff]
    %v113 = vld [vmem:[#allocation2 + $0x210] sm:$0xff]
    %v114 = vld [vmem:[#allocation2 + $0x218] sm:$0xff]
    %v115 = vld [vmem:[#allocation2 + $0x220] sm:$0xff]
    %v116 = vld [vmem:[#allocation2 + $0x228] sm:$0xff]
    %v117 = vld [vmem:[#allocation2 + $0x230] sm:$0xff]
    %v118 = vld [vmem:[#allocation2 + $0x238] sm:$0xff]
    %v119 = vld [vmem:[#allocation2 + $0x240] sm:$0xff]
    %v120 = vld [vmem:[#allocation2 + $0x248] sm:$0xff]
    %v121 = vld [vmem:[#allocation2 + $0x250] sm:$0xff]
    %v122 = vld [vmem:[#allocation2 + $0x258] sm:$0xff]
    %v123 = vld [vmem:[#allocation2 + $0x260] sm:$0xff]
    %v124 = vld [vmem:[#allocation2 + $0x268] sm:$0xff]
    %v125 = vld [vmem:[#allocation2 + $0x270] sm:$0xff]
    %v126 = vld [vmem:[#allocation2 + $0x278] sm:$0xff]
    %v127 = vld [vmem:[#allocation2 + $0x280] sm:$0xff]
    %v128 = vld [vmem:[#allocation2 + $0x288] sm:$0xff]
    %v129 = vld [vmem:[#allocation2 + $0x290] sm:$0xff]
    %v130 = vld [vmem:[#allocation2 + $0x298] sm:$0xff]
    %v131 = vld [vmem:[#allocation2 + $0x2a0] sm:$0xff]
    %v132 = vld [vmem:[#allocation2 + $0x2a8] sm:$0xff]
    %v133 = vld [vmem:[#allocation2 + $0x2b0] sm:$0xff]
    %v134 = vld [vmem:[#allocation2 + $0x2b8] sm:$0xff]
    %v135 = vld [vmem:[#allocation2 + $0x2c0] sm:$0xff]
    %v136 = vld [vmem:[#allocation2 + $0x2c8] sm:$0xff]
    %v137 = vld [vmem:[#allocation2 + $0x2d0] sm:$0xff]
    %v138 = vld [vmem:[#allocation2 + $0x2d8] sm:$0xff]
    %v139 = vld [vmem:[#allocation2 + $0x2e0] sm:$0xff]
    %v140 = vld [vmem:[#allocation2 + $0x2e8] sm:$0xff]
    %v141 = vld [vmem:[#allocation2 + $0x2f0] sm:$0xff]
    %v142 = vld [vmem:[#allocation2 + $0x2f8] sm:$0xff]
    %v143 = vld [vmem:[#allocation2 + $0x300] sm:$0xff]
    %v144 = vld [vmem:[#allocation2 + $0x308] sm:$0xff]
    %v145 = vld [vmem:[#allocation2 + $0x310] sm:$0xff]
    %v146 = vld [vmem:[#allocation2 + $0x318] sm:$0xff]
    %v147 = vld [vmem:[#allocation2 + $0x320] sm:$0xff]
    %v148 = vld [vmem:[#allocation2 + $0x328] sm:$0xff]
    %v149 = vld [vmem:[#allocation2 + $0x330] sm:$0xff]
    %v150 = vld [vmem:[#allocation2 + $0x338] sm:$0xff]
    %v151 = vld [vmem:[#allocation2 + $0x340] sm:$0xff]
    %v152 = vld [vmem:[#allocation2 + $0x348] sm:$0xff]
    %v153 = vld [vmem:[#allocation2 + $0x350] sm:$0xff]
    %v154 = vld [vmem:[#allocation2 + $0x358] sm:$0xff]
    %v155 = vld [vmem:[#allocation2 + $0x360] sm:$0xff]
    %v156 = vld [vmem:[#allocation2 + $0x368] sm:$0xff]
    %v157 = vld [vmem:[#allocation2 + $0x370] sm:$0xff]
    %v158 = vld [vmem:[#allocation2 + $0x378] sm:$0xff]
    %v159 = vld [vmem:[#allocation2 + $0x380] sm:$0xff]
    %v160 = vld [vmem:[#allocation2 + $0x388] sm:$0xff]
    %v161 = vld [vmem:[#allocation2 + $0x390] sm:$0xff]
    %v162 = vld [vmem:[#allocation2 + $0x398] sm:$0xff]
    %v163 = vld [vmem:[#allocation2 + $0x3a0] sm:$0xff]
    %v164 = vld [vmem:[#allocation2 + $0x3a8] sm:$0xff]
    %v165 = vld [vmem:[#allocation2 + $0x3b0] sm:$0xff]
    %v166 = vld [vmem:[#allocation2 + $0x3b8] sm:$0xff]
    %v167 = vld [vmem:[#allocation2 + $0x3c0] sm:$0xff]
    %v168 = vld [vmem:[#allocation2 + $0x3c8] sm:$0xff]
    %v169 = vld [vmem:[#allocation2 + $0x3d0] sm:$0xff]
    %v170 = vld [vmem:[#allocation2 + $0x3d8] sm:$0xff]
    %v171 = vld [vmem:[#allocation2 + $0x3e0] sm:$0xff]
    %v172 = vld [vmem:[#allocation2 + $0x3e8] sm:$0xff]
    %v173 = vld [vmem:[#allocation2 + $0x3f0] sm:$0xff]
    %v174 = vld [vmem:[#allocation2 + $0x3f8] sm:$0xff]
    %v175 = vld [vmem:[%s2] sm:$0x3]
    %v177 = vperm.slane %v175, 0
    %v178 = vperm.slane %v175, 1
    %v185 = vunpack.c.l.b16 %v43
    %v186 = vunpack.c.h.b16 %v43
    %v187 = vunpack.c.l.b16 %v44
    %v188 = vunpack.c.h.b16 %v44
    %v189 = vunpack.c.l.b16 %v45
    %v190 = vunpack.c.h.b16 %v45
    %v191 = vunpack.c.l.b16 %v46
    %v192 = vunpack.c.h.b16 %v46
    %v193 = vpack.c.b16 %v185, %v185
    %v194 = vpack.c.b16 %v186, %v186
    %v195 = vpack.c.b16 %v187, %v187
    %v196 = vpack.c.b16 %v188, %v188
    %v197 = vpack.c.b16 %v189, %v189
    %v198 = vpack.c.b16 %v190, %v190
    %v199 = vpack.c.b16 %v191, %v191
    %v200 = vpack.c.b16 %v192, %v192
    %v337 = vunpack.c.l.b16 %v47
    %v338 = vunpack.c.h.b16 %v47
    %v339 = vunpack.c.l.b16 %v48
    %v340 = vunpack.c.h.b16 %v48
    %v341 = vunpack.c.l.b16 %v49
    %v342 = vunpack.c.h.b16 %v49
    %v343 = vunpack.c.l.b16 %v50
    %v344 = vunpack.c.h.b16 %v50
    %v345 = vunpack.c.l.b16 %v51
    %v346 = vunpack.c.h.b16 %v51
    %v347 = vunpack.c.l.b16 %v52
    %v348 = vunpack.c.h.b16 %v52
    %v349 = vunpack.c.l.b16 %v53
    %v350 = vunpack.c.h.b16 %v53
    %v351 = vunpack.c.l.b16 %v54
    %v352 = vunpack.c.h.b16 %v54
    %v353 = vunpack.c.l.b16 %v55
    %v354 = vunpack.c.h.b16 %v55
    %v355 = vunpack.c.l.b16 %v56
    %v356 = vunpack.c.h.b16 %v56
    %v357 = vunpack.c.l.b16 %v57
    %v358 = vunpack.c.h.b16 %v57
    %v359 = vunpack.c.l.b16 %v58
    %v360 = vunpack.c.h.b16 %v58
    %v361 = vunpack.c.l.b16 %v59
    %v362 = vunpack.c.h.b16 %v59
    %v363 = vunpack.c.l.b16 %v60
    %v364 = vunpack.c.h.b16 %v60
    %v365 = vunpack.c.l.b16 %v61
    %v366 = vunpack.c.h.b16 %v61
    %v367 = vunpack.c.l.b16 %v62
    %v368 = vunpack.c.h.b16 %v62
    %v369 = vunpack.c.l.b16 %v63
    %v370 = vunpack.c.h.b16 %v63
    %v371 = vunpack.c.l.b16 %v64
    %v372 = vunpack.c.h.b16 %v64
    %v373 = vunpack.c.l.b16 %v65
    %v374 = vunpack.c.h.b16 %v65
    %v375 = vunpack.c.l.b16 %v66
    %v376 = vunpack.c.h.b16 %v66
    %v377 = vunpack.c.l.b16 %v67
    %v378 = vunpack.c.h.b16 %v67
    %v379 = vunpack.c.l.b16 %v68
    %v380 = vunpack.c.h.b16 %v68
    %v381 = vunpack.c.l.b16 %v69
    %v382 = vunpack.c.h.b16 %v69
    %v383 = vunpack.c.l.b16 %v70
    %v384 = vunpack.c.h.b16 %v70
    %v385 = vunpack.c.l.b16 %v71
    %v386 = vunpack.c.h.b16 %v71
    %v387 = vunpack.c.l.b16 %v72
    %v388 = vunpack.c.h.b16 %v72
    %v389 = vunpack.c.l.b16 %v73
    %v390 = vunpack.c.h.b16 %v73
    %v391 = vunpack.c.l.b16 %v74
    %v392 = vunpack.c.h.b16 %v74
    %v393 = vunpack.c.l.b16 %v75
    %v394 = vunpack.c.h.b16 %v75
    %v395 = vunpack.c.l.b16 %v76
    %v396 = vunpack.c.h.b16 %v76
    %v397 = vunpack.c.l.b16 %v77
    %v398 = vunpack.c.h.b16 %v77
    %v399 = vunpack.c.l.b16 %v78
    %v400 = vunpack.c.h.b16 %v78
    %v401 = vunpack.c.l.b16 %v79
    %v402 = vunpack.c.h.b16 %v79
    %v403 = vunpack.c.l.b16 %v80
    %v404 = vunpack.c.h.b16 %v80
    %v405 = vunpack.c.l.b16 %v81
    %v406 = vunpack.c.h.b16 %v81
    %v407 = vunpack.c.l.b16 %v82
    %v408 = vunpack.c.h.b16 %v82
    %v409 = vunpack.c.l.b16 %v83
    %v410 = vunpack.c.h.b16 %v83
    %v411 = vunpack.c.l.b16 %v84
    %v412 = vunpack.c.h.b16 %v84
    %v413 = vunpack.c.l.b16 %v85
    %v414 = vunpack.c.h.b16 %v85
    %v415 = vunpack.c.l.b16 %v86
    %v416 = vunpack.c.h.b16 %v86
    %v417 = vunpack.c.l.b16 %v87
    %v418 = vunpack.c.h.b16 %v87
    %v419 = vunpack.c.l.b16 %v88
    %v420 = vunpack.c.h.b16 %v88
    %v421 = vunpack.c.l.b16 %v89
    %v422 = vunpack.c.h.b16 %v89
    %v423 = vunpack.c.l.b16 %v90
    %v424 = vunpack.c.h.b16 %v90
    %v425 = vunpack.c.l.b16 %v91
    %v426 = vunpack.c.h.b16 %v91
    %v427 = vunpack.c.l.b16 %v92
    %v428 = vunpack.c.h.b16 %v92
    %v429 = vunpack.c.l.b16 %v93
    %v430 = vunpack.c.h.b16 %v93
    %v431 = vunpack.c.l.b16 %v94
    %v432 = vunpack.c.h.b16 %v94
    %v433 = vunpack.c.l.b16 %v95
    %v434 = vunpack.c.h.b16 %v95
    %v435 = vunpack.c.l.b16 %v96
    %v436 = vunpack.c.h.b16 %v96
    %v437 = vunpack.c.l.b16 %v97
    %v438 = vunpack.c.h.b16 %v97
    %v439 = vunpack.c.l.b16 %v98
    %v440 = vunpack.c.h.b16 %v98
    %v441 = vunpack.c.l.b16 %v99
    %v442 = vunpack.c.h.b16 %v99
    %v443 = vunpack.c.l.b16 %v100
    %v444 = vunpack.c.h.b16 %v100
    %v445 = vunpack.c.l.b16 %v101
    %v446 = vunpack.c.h.b16 %v101
    %v447 = vunpack.c.l.b16 %v102
    %v448 = vunpack.c.h.b16 %v102
    %v449 = vunpack.c.l.b16 %v103
    %v450 = vunpack.c.h.b16 %v103
    %v451 = vunpack.c.l.b16 %v104
    %v452 = vunpack.c.h.b16 %v104
    %v453 = vunpack.c.l.b16 %v105
    %v454 = vunpack.c.h.b16 %v105
    %v455 = vunpack.c.l.b16 %v106
    %v456 = vunpack.c.h.b16 %v106
    %v457 = vunpack.c.l.b16 %v107
    %v458 = vunpack.c.h.b16 %v107
    %v459 = vunpack.c.l.b16 %v108
    %v460 = vunpack.c.h.b16 %v108
    %v461 = vunpack.c.l.b16 %v109
    %v462 = vunpack.c.h.b16 %v109
    %v463 = vunpack.c.l.b16 %v110
    %v464 = vunpack.c.h.b16 %v110
    %v465 = vunpack.c.l.b16 %v111
    %v466 = vunpack.c.h.b16 %v111
    %v467 = vunpack.c.l.b16 %v112
    %v468 = vunpack.c.h.b16 %v112
    %v469 = vunpack.c.l.b16 %v113
    %v470 = vunpack.c.h.b16 %v113
    %v471 = vunpack.c.l.b16 %v114
    %v472 = vunpack.c.h.b16 %v114
    %v473 = vunpack.c.l.b16 %v115
    %v474 = vunpack.c.h.b16 %v115
    %v475 = vunpack.c.l.b16 %v116
    %v476 = vunpack.c.h.b16 %v116
    %v477 = vunpack.c.l.b16 %v117
    %v478 = vunpack.c.h.b16 %v117
    %v479 = vunpack.c.l.b16 %v118
    %v480 = vunpack.c.h.b16 %v118
    %v481 = vunpack.c.l.b16 %v119
    %v482 = vunpack.c.h.b16 %v119
    %v483 = vunpack.c.l.b16 %v120
    %v484 = vunpack.c.h.b16 %v120
    %v485 = vunpack.c.l.b16 %v121
    %v486 = vunpack.c.h.b16 %v121
    %v487 = vunpack.c.l.b16 %v122
    %v488 = vunpack.c.h.b16 %v122
    %v489 = vunpack.c.l.b16 %v123
    %v490 = vunpack.c.h.b16 %v123
    %v491 = vunpack.c.l.b16 %v124
    %v492 = vunpack.c.h.b16 %v124
    %v493 = vunpack.c.l.b16 %v125
    %v494 = vunpack.c.h.b16 %v125
    %v495 = vunpack.c.l.b16 %v126
    %v496 = vunpack.c.h.b16 %v126
    %v497 = vunpack.c.l.b16 %v127
    %v498 = vunpack.c.h.b16 %v127
    %v499 = vunpack.c.l.b16 %v128
    %v500 = vunpack.c.h.b16 %v128
    %v501 = vunpack.c.l.b16 %v129
    %v502 = vunpack.c.h.b16 %v129
    %v503 = vunpack.c.l.b16 %v130
    %v504 = vunpack.c.h.b16 %v130
    %v505 = vunpack.c.l.b16 %v131
    %v506 = vunpack.c.h.b16 %v131
    %v507 = vunpack.c.l.b16 %v132
    %v508 = vunpack.c.h.b16 %v132
    %v509 = vunpack.c.l.b16 %v133
    %v510 = vunpack.c.h.b16 %v133
    %v511 = vunpack.c.l.b16 %v134
    %v512 = vunpack.c.h.b16 %v134
    %v513 = vunpack.c.l.b16 %v135
    %v514 = vunpack.c.h.b16 %v135
    %v515 = vunpack.c.l.b16 %v136
    %v516 = vunpack.c.h.b16 %v136
    %v517 = vunpack.c.l.b16 %v137
    %v518 = vunpack.c.h.b16 %v137
    %v519 = vunpack.c.l.b16 %v138
    %v520 = vunpack.c.h.b16 %v138
    %v521 = vunpack.c.l.b16 %v139
    %v522 = vunpack.c.h.b16 %v139
    %v523 = vunpack.c.l.b16 %v140
    %v524 = vunpack.c.h.b16 %v140
    %v525 = vunpack.c.l.b16 %v141
    %v526 = vunpack.c.h.b16 %v141
    %v527 = vunpack.c.l.b16 %v142
    %v528 = vunpack.c.h.b16 %v142
    %v529 = vunpack.c.l.b16 %v143
    %v530 = vunpack.c.h.b16 %v143
    %v531 = vunpack.c.l.b16 %v144
    %v532 = vunpack.c.h.b16 %v144
    %v533 = vunpack.c.l.b16 %v145
    %v534 = vunpack.c.h.b16 %v145
    %v535 = vunpack.c.l.b16 %v146
    %v536 = vunpack.c.h.b16 %v146
    %v537 = vunpack.c.l.b16 %v147
    %v538 = vunpack.c.h.b16 %v147
    %v539 = vunpack.c.l.b16 %v148
    %v540 = vunpack.c.h.b16 %v148
    %v541 = vunpack.c.l.b16 %v149
    %v542 = vunpack.c.h.b16 %v149
    %v543 = vunpack.c.l.b16 %v150
    %v544 = vunpack.c.h.b16 %v150
    %v545 = vunpack.c.l.b16 %v151
    %v546 = vunpack.c.h.b16 %v151
    %v547 = vunpack.c.l.b16 %v152
    %v548 = vunpack.c.h.b16 %v152
    %v549 = vunpack.c.l.b16 %v153
    %v550 = vunpack.c.h.b16 %v153
    %v551 = vunpack.c.l.b16 %v154
    %v552 = vunpack.c.h.b16 %v154
    %v553 = vunpack.c.l.b16 %v155
    %v554 = vunpack.c.h.b16 %v155
    %v555 = vunpack.c.l.b16 %v156
    %v556 = vunpack.c.h.b16 %v156
    %v557 = vunpack.c.l.b16 %v157
    %v558 = vunpack.c.h.b16 %v157
    %v559 = vunpack.c.l.b16 %v158
    %v560 = vunpack.c.h.b16 %v158
    %v561 = vunpack.c.l.b16 %v159
    %v562 = vunpack.c.h.b16 %v159
    %v563 = vunpack.c.l.b16 %v160
    %v564 = vunpack.c.h.b16 %v160
    %v565 = vunpack.c.l.b16 %v161
    %v566 = vunpack.c.h.b16 %v161
    %v567 = vunpack.c.l.b16 %v162
    %v568 = vunpack.c.h.b16 %v162
    %v569 = vunpack.c.l.b16 %v163
    %v570 = vunpack.c.h.b16 %v163
    %v571 = vunpack.c.l.b16 %v164
    %v572 = vunpack.c.h.b16 %v164
    %v573 = vunpack.c.l.b16 %v165
    %v574 = vunpack.c.h.b16 %v165
    %v575 = vunpack.c.l.b16 %v166
    %v576 = vunpack.c.h.b16 %v166
    %v577 = vunpack.c.l.b16 %v167
    %v578 = vunpack.c.h.b16 %v167
    %v579 = vunpack.c.l.b16 %v168
    %v580 = vunpack.c.h.b16 %v168
    %v581 = vunpack.c.l.b16 %v169
    %v582 = vunpack.c.h.b16 %v169
    %v583 = vunpack.c.l.b16 %v170
    %v584 = vunpack.c.h.b16 %v170
    %v585 = vunpack.c.l.b16 %v171
    %v586 = vunpack.c.h.b16 %v171
    %v587 = vunpack.c.l.b16 %v172
    %v588 = vunpack.c.h.b16 %v172
    %v589 = vunpack.c.l.b16 %v173
    %v590 = vunpack.c.h.b16 %v173
    %v591 = vunpack.c.l.b16 %v174
    %v592 = vunpack.c.h.b16 %v174
    %v593 = vpack.c.b16 %v339, %v337
    %v594 = vpack.c.b16 %v340, %v338
    %v595 = vpack.c.b16 %v343, %v341
    %v596 = vpack.c.b16 %v344, %v342
    %v597 = vpack.c.b16 %v347, %v345
    %v598 = vpack.c.b16 %v348, %v346
    %v599 = vpack.c.b16 %v351, %v349
    %v600 = vpack.c.b16 %v352, %v350
    %v601 = vpack.c.b16 %v355, %v353
    %v602 = vpack.c.b16 %v356, %v354
    %v603 = vpack.c.b16 %v359, %v357
    %v604 = vpack.c.b16 %v360, %v358
    %v605 = vpack.c.b16 %v363, %v361
    %v606 = vpack.c.b16 %v364, %v362
    %v607 = vpack.c.b16 %v367, %v365
    %v608 = vpack.c.b16 %v368, %v366
    %v609 = vpack.c.b16 %v371, %v369
    %v610 = vpack.c.b16 %v372, %v370
    %v611 = vpack.c.b16 %v375, %v373
    %v612 = vpack.c.b16 %v376, %v374
    %v613 = vpack.c.b16 %v379, %v377
    %v614 = vpack.c.b16 %v380, %v378
    %v615 = vpack.c.b16 %v383, %v381
    %v616 = vpack.c.b16 %v384, %v382
    %v617 = vpack.c.b16 %v387, %v385
    %v618 = vpack.c.b16 %v388, %v386
    %v619 = vpack.c.b16 %v391, %v389
    %v620 = vpack.c.b16 %v392, %v390
    %v621 = vpack.c.b16 %v395, %v393
    %v622 = vpack.c.b16 %v396, %v394
    %v623 = vpack.c.b16 %v399, %v397
    %v624 = vpack.c.b16 %v400, %v398
    %v625 = vpack.c.b16 %v403, %v401
    %v626 = vpack.c.b16 %v404, %v402
    %v627 = vpack.c.b16 %v407, %v405
    %v628 = vpack.c.b16 %v408, %v406
    %v629 = vpack.c.b16 %v411, %v409
    %v630 = vpack.c.b16 %v412, %v410
    %v631 = vpack.c.b16 %v415, %v413
    %v632 = vpack.c.b16 %v416, %v414
    %v633 = vpack.c.b16 %v419, %v417
    %v634 = vpack.c.b16 %v420, %v418
    %v635 = vpack.c.b16 %v423, %v421
    %v636 = vpack.c.b16 %v424, %v422
    %v637 = vpack.c.b16 %v427, %v425
    %v638 = vpack.c.b16 %v428, %v426
    %v639 = vpack.c.b16 %v431, %v429
    %v640 = vpack.c.b16 %v432, %v430
    %v641 = vpack.c.b16 %v435, %v433
    %v642 = vpack.c.b16 %v436, %v434
    %v643 = vpack.c.b16 %v439, %v437
    %v644 = vpack.c.b16 %v440, %v438
    %v645 = vpack.c.b16 %v443, %v441
    %v646 = vpack.c.b16 %v444, %v442
    %v647 = vpack.c.b16 %v447, %v445
    %v648 = vpack.c.b16 %v448, %v446
    %v649 = vpack.c.b16 %v451, %v449
    %v650 = vpack.c.b16 %v452, %v450
    %v651 = vpack.c.b16 %v455, %v453
    %v652 = vpack.c.b16 %v456, %v454
    %v653 = vpack.c.b16 %v459, %v457
    %v654 = vpack.c.b16 %v460, %v458
    %v655 = vpack.c.b16 %v463, %v461
    %v656 = vpack.c.b16 %v464, %v462
    %v657 = vpack.c.b16 %v467, %v465
    %v658 = vpack.c.b16 %v468, %v466
    %v659 = vpack.c.b16 %v471, %v469
    %v660 = vpack.c.b16 %v472, %v470
    %v661 = vpack.c.b16 %v475, %v473
    %v662 = vpack.c.b16 %v476, %v474
    %v663 = vpack.c.b16 %v479, %v477
    %v664 = vpack.c.b16 %v480, %v478
    %v665 = vpack.c.b16 %v483, %v481
    %v666 = vpack.c.b16 %v484, %v482
    %v667 = vpack.c.b16 %v487, %v485
    %v668 = vpack.c.b16 %v488, %v486
    %v669 = vpack.c.b16 %v491, %v489
    %v670 = vpack.c.b16 %v492, %v490
    %v671 = vpack.c.b16 %v495, %v493
    %v672 = vpack.c.b16 %v496, %v494
    %v673 = vpack.c.b16 %v499, %v497
    %v674 = vpack.c.b16 %v500, %v498
    %v675 = vpack.c.b16 %v503, %v501
    %v676 = vpack.c.b16 %v504, %v502
    %v677 = vpack.c.b16 %v507, %v505
    %v678 = vpack.c.b16 %v508, %v506
    %v679 = vpack.c.b16 %v511, %v509
    %v680 = vpack.c.b16 %v512, %v510
    %v681 = vpack.c.b16 %v515, %v513
    %v682 = vpack.c.b16 %v516, %v514
    %v683 = vpack.c.b16 %v519, %v517
    %v684 = vpack.c.b16 %v520, %v518
    %v685 = vpack.c.b16 %v523, %v521
    %v686 = vpack.c.b16 %v524, %v522
    %v687 = vpack.c.b16 %v527, %v525
    %v688 = vpack.c.b16 %v528, %v526
    %v689 = vpack.c.b16 %v531, %v529
    %v690 = vpack.c.b16 %v532, %v530
    %v691 = vpack.c.b16 %v535, %v533
    %v692 = vpack.c.b16 %v536, %v534
    %v693 = vpack.c.b16 %v539, %v537
    %v694 = vpack.c.b16 %v540, %v538
    %v695 = vpack.c.b16 %v543, %v541
    %v696 = vpack.c.b16 %v544, %v542
    %v697 = vpack.c.b16 %v547, %v545
    %v698 = vpack.c.b16 %v548, %v546
    %v699 = vpack.c.b16 %v551, %v549
    %v700 = vpack.c.b16 %v552, %v550
    %v701 = vpack.c.b16 %v555, %v553
    %v702 = vpack.c.b16 %v556, %v554
    %v703 = vpack.c.b16 %v559, %v557
    %v704 = vpack.c.b16 %v560, %v558
    %v705 = vpack.c.b16 %v563, %v561
    %v706 = vpack.c.b16 %v564, %v562
    %v707 = vpack.c.b16 %v567, %v565
    %v708 = vpack.c.b16 %v568, %v566
    %v709 = vpack.c.b16 %v571, %v569
    %v710 = vpack.c.b16 %v572, %v570
    %v711 = vpack.c.b16 %v575, %v573
    %v712 = vpack.c.b16 %v576, %v574
    %v713 = vpack.c.b16 %v579, %v577
    %v714 = vpack.c.b16 %v580, %v578
    %v715 = vpack.c.b16 %v583, %v581
    %v716 = vpack.c.b16 %v584, %v582
    %v717 = vpack.c.b16 %v587, %v585
    %v718 = vpack.c.b16 %v588, %v586
    %v719 = vpack.c.b16 %v591, %v589
    %v720 = vpack.c.b16 %v592, %v590
    %849 = vmatpush.bf16.msra.mxu0 %v607
    %850 = vmatpush.bf16.msra.mxu0 %v605
    %851 = vmatpush.bf16.msra.mxu0 %v603
    %852 = vmatpush.bf16.msra.mxu0 %v601
    %853 = vmatpush.bf16.msra.mxu0 %v599
    %854 = vmatpush.bf16.msra.mxu0 %v597
    %855 = vmatpush.bf16.msra.mxu0 %v595
    %856 = vmatpush.bf16.msra.mxu0 %v593
    %857 = vmatmul.bf16.gmra.mxu0 %v193
    %v858 = vpop.f32.mrf.mxu0
    %v859 = vadd.f32 %v177, %v858
    %v860 = vpop.f32.mrf.mxu0
    %861 = vdwg.mxu0
    %862 = vmatpush.bf16.msra.mxu0 %v623
    %863 = vmatpush.bf16.msra.mxu0 %v621
    %864 = vmatpush.bf16.msra.mxu0 %v619
    %865 = vmatpush.bf16.msra.mxu0 %v617
    %866 = vmatpush.bf16.msra.mxu0 %v615
    %867 = vmatpush.bf16.msra.mxu0 %v613
    %868 = vmatpush.bf16.msra.mxu0 %v611
    %869 = vmatpush.bf16.msra.mxu0 %v609
    %870 = vmatmul.bf16.gmra.mxu0 %v194
    %v871 = vpop.f32.mrf.mxu0
    %v872 = vadd.f32 %v859, %v871
    %v873 = vpop.f32.mrf.mxu0
    %874 = vdwg.mxu0
    %875 = vmatpush.bf16.msra.mxu0 %v639
    %876 = vmatpush.bf16.msra.mxu0 %v637
    %877 = vmatpush.bf16.msra.mxu0 %v635
    %878 = vmatpush.bf16.msra.mxu0 %v633
    %879 = vmatpush.bf16.msra.mxu0 %v631
    %880 = vmatpush.bf16.msra.mxu0 %v629
    %881 = vmatpush.bf16.msra.mxu0 %v627
    %882 = vmatpush.bf16.msra.mxu0 %v625
    %883 = vmatmul.bf16.gmra.mxu0 %v195
    %v884 = vpop.f32.mrf.mxu0
    %v885 = vadd.f32 %v872, %v884
    %v886 = vpop.f32.mrf.mxu0
    %887 = vdwg.mxu0
    %888 = vmatpush.bf16.msra.mxu0 %v655
    %889 = vmatpush.bf16.msra.mxu0 %v653
    %890 = vmatpush.bf16.msra.mxu0 %v651
    %891 = vmatpush.bf16.msra.mxu0 %v649
    %892 = vmatpush.bf16.msra.mxu0 %v647
    %893 = vmatpush.bf16.msra.mxu0 %v645
    %894 = vmatpush.bf16.msra.mxu0 %v643
    %895 = vmatpush.bf16.msra.mxu0 %v641
    %896 = vmatmul.bf16.gmra.mxu0 %v196
    %v897 = vpop.f32.mrf.mxu0
    %v898 = vadd.f32 %v885, %v897
    %v899 = vpop.f32.mrf.mxu0
    %900 = vdwg.mxu0
    %901 = vmatpush.bf16.msra.mxu0 %v671
    %902 = vmatpush.bf16.msra.mxu0 %v669
    %903 = vmatpush.bf16.msra.mxu0 %v667
    %904 = vmatpush.bf16.msra.mxu0 %v665
    %905 = vmatpush.bf16.msra.mxu0 %v663
    %906 = vmatpush.bf16.msra.mxu0 %v661
    %907 = vmatpush.bf16.msra.mxu0 %v659
    %908 = vmatpush.bf16.msra.mxu0 %v657
    %909 = vmatmul.bf16.gmra.mxu0 %v197
    %v910 = vpop.f32.mrf.mxu0
    %v911 = vadd.f32 %v898, %v910
    %v912 = vpop.f32.mrf.mxu0
    %913 = vdwg.mxu0
    %914 = vmatpush.bf16.msra.mxu0 %v687
    %915 = vmatpush.bf16.msra.mxu0 %v685
    %916 = vmatpush.bf16.msra.mxu0 %v683
    %917 = vmatpush.bf16.msra.mxu0 %v681
    %918 = vmatpush.bf16.msra.mxu0 %v679
    %919 = vmatpush.bf16.msra.mxu0 %v677
    %920 = vmatpush.bf16.msra.mxu0 %v675
    %921 = vmatpush.bf16.msra.mxu0 %v673
    %922 = vmatmul.bf16.gmra.mxu0 %v198
    %v923 = vpop.f32.mrf.mxu0
    %v924 = vadd.f32 %v911, %v923
    %v925 = vpop.f32.mrf.mxu0
    %926 = vdwg.mxu0
    %927 = vmatpush.bf16.msra.mxu0 %v703
    %928 = vmatpush.bf16.msra.mxu0 %v701
    %929 = vmatpush.bf16.msra.mxu0 %v699
    %930 = vmatpush.bf16.msra.mxu0 %v697
    %931 = vmatpush.bf16.msra.mxu0 %v695
    %932 = vmatpush.bf16.msra.mxu0 %v693
    %933 = vmatpush.bf16.msra.mxu0 %v691
    %934 = vmatpush.bf16.msra.mxu0 %v689
    %935 = vmatmul.bf16.gmra.mxu0 %v199
    %v936 = vpop.f32.mrf.mxu0
    %v937 = vadd.f32 %v924, %v936
    %v938 = vpop.f32.mrf.mxu0
    %939 = vdwg.mxu0
    %940 = vmatpush.bf16.msra.mxu0 %v719
    %941 = vmatpush.bf16.msra.mxu0 %v717
    %942 = vmatpush.bf16.msra.mxu0 %v715
    %943 = vmatpush.bf16.msra.mxu0 %v713
    %944 = vmatpush.bf16.msra.mxu0 %v711
    %945 = vmatpush.bf16.msra.mxu0 %v709
    %946 = vmatpush.bf16.msra.mxu0 %v707
    %947 = vmatpush.bf16.msra.mxu0 %v705
    %948 = vmatmul.bf16.gmra.mxu0 %v200
    %v949 = vpop.f32.mrf.mxu0
    %v950 = vadd.f32 %v937, %v949
    %v951 = vpop.f32.mrf.mxu0
    %952 = vdwg.mxu0
    %953 = vmatpush.bf16.msra.mxu0 %v608
    %954 = vmatpush.bf16.msra.mxu0 %v606
    %955 = vmatpush.bf16.msra.mxu0 %v604
    %956 = vmatpush.bf16.msra.mxu0 %v602
    %957 = vmatpush.bf16.msra.mxu0 %v600
    %958 = vmatpush.bf16.msra.mxu0 %v598
    %959 = vmatpush.bf16.msra.mxu0 %v596
    %960 = vmatpush.bf16.msra.mxu0 %v594
    %961 = vmatmul.bf16.gmra.mxu0 %v193
    %v962 = vpop.f32.mrf.mxu0
    %v963 = vadd.f32 %v178, %v962
    %v964 = vpop.f32.mrf.mxu0
    %965 = vdwg.mxu0
    %966 = vmatpush.bf16.msra.mxu0 %v624
    %967 = vmatpush.bf16.msra.mxu0 %v622
    %968 = vmatpush.bf16.msra.mxu0 %v620
    %969 = vmatpush.bf16.msra.mxu0 %v618
    %970 = vmatpush.bf16.msra.mxu0 %v616
    %971 = vmatpush.bf16.msra.mxu0 %v614
    %972 = vmatpush.bf16.msra.mxu0 %v612
    %973 = vmatpush.bf16.msra.mxu0 %v610
    %974 = vmatmul.bf16.gmra.mxu0 %v194
    %v975 = vpop.f32.mrf.mxu0
    %v976 = vadd.f32 %v963, %v975
    %v977 = vpop.f32.mrf.mxu0
    %978 = vdwg.mxu0
    %979 = vmatpush.bf16.msra.mxu0 %v640
    %980 = vmatpush.bf16.msra.mxu0 %v638
    %981 = vmatpush.bf16.msra.mxu0 %v636
    %982 = vmatpush.bf16.msra.mxu0 %v634
    %983 = vmatpush.bf16.msra.mxu0 %v632
    %984 = vmatpush.bf16.msra.mxu0 %v630
    %985 = vmatpush.bf16.msra.mxu0 %v628
    %986 = vmatpush.bf16.msra.mxu0 %v626
    %987 = vmatmul.bf16.gmra.mxu0 %v195
    %v988 = vpop.f32.mrf.mxu0
    %v989 = vadd.f32 %v976, %v988
    %v990 = vpop.f32.mrf.mxu0
    %991 = vdwg.mxu0
    %992 = vmatpush.bf16.msra.mxu0 %v656
    %993 = vmatpush.bf16.msra.mxu0 %v654
    %994 = vmatpush.bf16.msra.mxu0 %v652
    %995 = vmatpush.bf16.msra.mxu0 %v650
    %996 = vmatpush.bf16.msra.mxu0 %v648
    %997 = vmatpush.bf16.msra.mxu0 %v646
    %998 = vmatpush.bf16.msra.mxu0 %v644
    %999 = vmatpush.bf16.msra.mxu0 %v642
    %1000 = vmatmul.bf16.gmra.mxu0 %v196
    %v1001 = vpop.f32.mrf.mxu0
    %v1002 = vadd.f32 %v989, %v1001
    %v1003 = vpop.f32.mrf.mxu0
    %1004 = vdwg.mxu0
    %1005 = vmatpush.bf16.msra.mxu0 %v672
    %1006 = vmatpush.bf16.msra.mxu0 %v670
    %1007 = vmatpush.bf16.msra.mxu0 %v668
    %1008 = vmatpush.bf16.msra.mxu0 %v666
    %1009 = vmatpush.bf16.msra.mxu0 %v664
    %1010 = vmatpush.bf16.msra.mxu0 %v662
    %1011 = vmatpush.bf16.msra.mxu0 %v660
    %1012 = vmatpush.bf16.msra.mxu0 %v658
    %1013 = vmatmul.bf16.gmra.mxu0 %v197
    %v1014 = vpop.f32.mrf.mxu0
    %v1015 = vadd.f32 %v1002, %v1014
    %v1016 = vpop.f32.mrf.mxu0
    %1017 = vdwg.mxu0
    %1018 = vmatpush.bf16.msra.mxu0 %v688
    %1019 = vmatpush.bf16.msra.mxu0 %v686
    %1020 = vmatpush.bf16.msra.mxu0 %v684
    %1021 = vmatpush.bf16.msra.mxu0 %v682
    %1022 = vmatpush.bf16.msra.mxu0 %v680
    %1023 = vmatpush.bf16.msra.mxu0 %v678
    %1024 = vmatpush.bf16.msra.mxu0 %v676
    %1025 = vmatpush.bf16.msra.mxu0 %v674
    %1026 = vmatmul.bf16.gmra.mxu0 %v198
    %v1027 = vpop.f32.mrf.mxu0
    %v1028 = vadd.f32 %v1015, %v1027
    %v1029 = vpop.f32.mrf.mxu0
    %1030 = vdwg.mxu0
    %1031 = vmatpush.bf16.msra.mxu0 %v704
    %1032 = vmatpush.bf16.msra.mxu0 %v702
    %1033 = vmatpush.bf16.msra.mxu0 %v700
    %1034 = vmatpush.bf16.msra.mxu0 %v698
    %1035 = vmatpush.bf16.msra.mxu0 %v696
    %1036 = vmatpush.bf16.msra.mxu0 %v694
    %1037 = vmatpush.bf16.msra.mxu0 %v692
    %1038 = vmatpush.bf16.msra.mxu0 %v690
    %1039 = vmatmul.bf16.gmra.mxu0 %v199
    %v1040 = vpop.f32.mrf.mxu0
    %v1041 = vadd.f32 %v1028, %v1040
    %v1042 = vpop.f32.mrf.mxu0
    %1043 = vdwg.mxu0
    %1044 = vmatpush.bf16.msra.mxu0 %v720
    %1045 = vmatpush.bf16.msra.mxu0 %v718
    %1046 = vmatpush.bf16.msra.mxu0 %v716
    %1047 = vmatpush.bf16.msra.mxu0 %v714
    %1048 = vmatpush.bf16.msra.mxu0 %v712
    %1049 = vmatpush.bf16.msra.mxu0 %v710
    %1050 = vmatpush.bf16.msra.mxu0 %v708
    %1051 = vmatpush.bf16.msra.mxu0 %v706
    %1052 = vmatmul.bf16.gmra.mxu0 %v200
    %v1053 = vpop.f32.mrf.mxu0
    %v1054 = vadd.f32 %v1041, %v1053
    %v1055 = vpop.f32.mrf.mxu0
    %1056 = vdwg.mxu0
    %v1057 = vmax.f32 %v950, 0.0
    %v1058 = vmax.f32 %v1054, 0.0
    %v1059 = vpack.c.bf16 %v1057, %v1057
    %v1060 = vpack.c.bf16 %v1058, %v1058
    %v1061 = vld [vmem:[%s3] sm:$0xf]
    %v1062 = vld [vmem:[%s3 + $0x4] sm:$0xf]
    %v1063 = vld [vmem:[%s3 + $0x8] sm:$0xf]
    %v1064 = vld [vmem:[%s3 + $0xc] sm:$0xf]
    %v1065 = vld [vmem:[%s3 + $0x10] sm:$0xf]
    %v1066 = vld [vmem:[%s3 + $0x14] sm:$0xf]
    %v1067 = vld [vmem:[%s3 + $0x18] sm:$0xf]
    %v1068 = vld [vmem:[%s3 + $0x1c] sm:$0xf]
    %v1069 = vld [vmem:[%s3 + $0x20] sm:$0xf]
    %v1070 = vld [vmem:[%s3 + $0x24] sm:$0xf]
    %v1071 = vld [vmem:[%s3 + $0x28] sm:$0xf]
    %v1072 = vld [vmem:[%s3 + $0x2c] sm:$0xf]
    %v1073 = vld [vmem:[%s3 + $0x30] sm:$0xf]
    %v1074 = vld [vmem:[%s3 + $0x34] sm:$0xf]
    %v1075 = vld [vmem:[%s3 + $0x38] sm:$0xf]
    %v1076 = vld [vmem:[%s3 + $0x3c] sm:$0xf]
    %v1077 = vld [vmem:[%s3 + $0x40] sm:$0xf]
    %v1078 = vld [vmem:[%s3 + $0x44] sm:$0xf]
    %v1079 = vld [vmem:[%s3 + $0x48] sm:$0xf]
    %v1080 = vld [vmem:[%s3 + $0x4c] sm:$0xf]
    %v1081 = vld [vmem:[%s3 + $0x50] sm:$0xf]
    %v1082 = vld [vmem:[%s3 + $0x54] sm:$0xf]
    %v1083 = vld [vmem:[%s3 + $0x58] sm:$0xf]
    %v1084 = vld [vmem:[%s3 + $0x5c] sm:$0xf]
    %v1085 = vld [vmem:[%s3 + $0x60] sm:$0xf]
    %v1086 = vld [vmem:[%s3 + $0x64] sm:$0xf]
    %v1087 = vld [vmem:[%s3 + $0x68] sm:$0xf]
    %v1088 = vld [vmem:[%s3 + $0x6c] sm:$0xf]
    %v1089 = vld [vmem:[%s3 + $0x70] sm:$0xf]
    %v1090 = vld [vmem:[%s3 + $0x74] sm:$0xf]
    %v1091 = vld [vmem:[%s3 + $0x78] sm:$0xf]
    %v1092 = vld [vmem:[%s3 + $0x7c] sm:$0xf]
    %v1093 = vld [vmem:[%s4] sm:$0x1]
    %v1095 = vperm.slane %v1093, 0
    %v1129 = vunpack.c.l.b16 %v1061
    %v1130 = vunpack.c.l.b16 %v1062
    %v1131 = vunpack.c.l.b16 %v1063
    %v1132 = vunpack.c.l.b16 %v1064
    %v1133 = vunpack.c.l.b16 %v1065
    %v1134 = vunpack.c.l.b16 %v1066
    %v1135 = vunpack.c.l.b16 %v1067
    %v1136 = vunpack.c.l.b16 %v1068
    %v1137 = vunpack.c.l.b16 %v1069
    %v1138 = vunpack.c.l.b16 %v1070
    %v1139 = vunpack.c.l.b16 %v1071
    %v1140 = vunpack.c.l.b16 %v1072
    %v1141 = vunpack.c.l.b16 %v1073
    %v1142 = vunpack.c.l.b16 %v1074
    %v1143 = vunpack.c.l.b16 %v1075
    %v1144 = vunpack.c.l.b16 %v1076
    %v1145 = vunpack.c.l.b16 %v1077
    %v1146 = vunpack.c.l.b16 %v1078
    %v1147 = vunpack.c.l.b16 %v1079
    %v1148 = vunpack.c.l.b16 %v1080
    %v1149 = vunpack.c.l.b16 %v1081
    %v1150 = vunpack.c.l.b16 %v1082
    %v1151 = vunpack.c.l.b16 %v1083
    %v1152 = vunpack.c.l.b16 %v1084
    %v1153 = vunpack.c.l.b16 %v1085
    %v1154 = vunpack.c.l.b16 %v1086
    %v1155 = vunpack.c.l.b16 %v1087
    %v1156 = vunpack.c.l.b16 %v1088
    %v1157 = vunpack.c.l.b16 %v1089
    %v1158 = vunpack.c.l.b16 %v1090
    %v1159 = vunpack.c.l.b16 %v1091
    %v1160 = vunpack.c.l.b16 %v1092
    %v1161 = vpack.c.b16 %v1130, %v1129
    %v1162 = vpack.c.b16 %v1132, %v1131
    %v1163 = vpack.c.b16 %v1134, %v1133
    %v1164 = vpack.c.b16 %v1136, %v1135
    %v1165 = vpack.c.b16 %v1138, %v1137
    %v1166 = vpack.c.b16 %v1140, %v1139
    %v1167 = vpack.c.b16 %v1142, %v1141
    %v1168 = vpack.c.b16 %v1144, %v1143
    %v1169 = vpack.c.b16 %v1146, %v1145
    %v1170 = vpack.c.b16 %v1148, %v1147
    %v1171 = vpack.c.b16 %v1150, %v1149
    %v1172 = vpack.c.b16 %v1152, %v1151
    %v1173 = vpack.c.b16 %v1154, %v1153
    %v1174 = vpack.c.b16 %v1156, %v1155
    %v1175 = vpack.c.b16 %v1158, %v1157
    %v1176 = vpack.c.b16 %v1160, %v1159
    %1193 = vmatpush.bf16.msra.mxu0 %v1168
    %1194 = vmatpush.bf16.msra.mxu0 %v1167
    %1195 = vmatpush.bf16.msra.mxu0 %v1166
    %1196 = vmatpush.bf16.msra.mxu0 %v1165
    %1197 = vmatpush.bf16.msra.mxu0 %v1164
    %1198 = vmatpush.bf16.msra.mxu0 %v1163
    %1199 = vmatpush.bf16.msra.mxu0 %v1162
    %1200 = vmatpush.bf16.msra.mxu0 %v1161
    %1201 = vmatmul.bf16.gmra.mxu0 %v1059
    %v1202 = vpop.f32.mrf.mxu0
    %v1203 = vadd.f32 %v1095, %v1202
    %v1204 = vpop.f32.mrf.mxu0
    %1205 = vdwg.mxu0
    %1206 = vmatpush.bf16.msra.mxu0 %v1176
    %1207 = vmatpush.bf16.msra.mxu0 %v1175
    %1208 = vmatpush.bf16.msra.mxu0 %v1174
    %1209 = vmatpush.bf16.msra.mxu0 %v1173
    %1210 = vmatpush.bf16.msra.mxu0 %v1172
    %1211 = vmatpush.bf16.msra.mxu0 %v1171
    %1212 = vmatpush.bf16.msra.mxu0 %v1170
    %1213 = vmatpush.bf16.msra.mxu0 %v1169
    %1214 = vmatmul.bf16.gmra.mxu0 %v1060
    %v1215 = vpop.f32.mrf.mxu0
    %v1216 = vadd.f32 %v1203, %v1215
    %v1217 = vpop.f32.mrf.mxu0
    %1218 = vdwg.mxu0
    %v1219 = vmax.f32 %v1216, 0.0
    %v1220 = vpack.c.bf16 %v1219, %v1219
    %v1221 = vld [vmem:[%s5] sm:$0xf]
    %v1222 = vld [vmem:[%s5 + $0x4] sm:$0xf]
    %v1223 = vld [vmem:[%s5 + $0x8] sm:$0xf]
    %v1224 = vld [vmem:[%s5 + $0xc] sm:$0xf]
    %v1225 = vld [vmem:[%s5 + $0x10] sm:$0xf]
    %v1226 = vld [vmem:[%s5 + $0x14] sm:$0xf]
    %v1227 = vld [vmem:[%s5 + $0x18] sm:$0xf]
    %v1228 = vld [vmem:[%s5 + $0x1c] sm:$0xf]
    %v1229 = vld [vmem:[%s6] sm:$0x1]
    %v1231 = vperm.slane %v1229, 0
    %v1241 = vunpack.c.l.b16 %v1221
    %v1242 = vunpack.c.l.b16 %v1222
    %v1243 = vunpack.c.l.b16 %v1223
    %v1244 = vunpack.c.l.b16 %v1224
    %v1245 = vunpack.c.l.b16 %v1225
    %v1246 = vunpack.c.l.b16 %v1226
    %v1247 = vunpack.c.l.b16 %v1227
    %v1248 = vunpack.c.l.b16 %v1228
    %v1249 = vpack.c.b16 %v1242, %v1241
    %v1250 = vpack.c.b16 %v1244, %v1243
    %v1251 = vpack.c.b16 %v1246, %v1245
    %v1252 = vpack.c.b16 %v1248, %v1247
    %vm1257 = vcmask 523264
    %v1259 = vsel %vm1257, %v1220, 0
    %1261 = vmatpush.bf16.msra.mxu0 0
    %1262 = vmatpush.bf16.msra.mxu0 0
    %1263 = vmatpush.bf16.msra.mxu0 0
    %1264 = vmatpush.bf16.msra.mxu0 0
    %1265 = vmatpush.bf16.msra.mxu0 %v1252
    %1266 = vmatpush.bf16.msra.mxu0 %v1251
    %1267 = vmatpush.bf16.msra.mxu0 %v1250
    %1268 = vmatpush.bf16.msra.mxu0 %v1249
    %1269 = vmatmul.bf16.gmra.mxu0 %v1259
    %v1270 = vpop.f32.mrf.mxu0
    %v1271 = vadd.f32 %v1231, %v1270
    %v1272 = vpop.f32.mrf.mxu0
    %1273 = vdwg.mxu0
    %1274 = vst [vmem:[%s7] sm:$0xff] %v1271
    // Predicated region
    $region34: #{dqn_forward.1} parent=1 // pred_check
      _
    $region35: #{dqn_forward.1} parent=1 // pred_check_branch
      %1276 = sbr.rel (0) target = $region37
    $region36: #{dqn_forward.1} parent=1 // pred_region
      _
    $region37: #{dqn_forward.1} parent=1 // pred_fallthru
      _
    // Predicated region
    $region38: #{dqn_forward.1} parent=1 // pred_check
      _
    $region39: #{dqn_forward.1} parent=1 // pred_check_branch
      %1278 = sbr.rel (0) target = $region41
    $region40: #{dqn_forward.1} parent=1 // pred_region
      _
    $region41: #{dqn_forward.1} parent=1 // pred_fallthru
      _
    %1279 = vsyncpa [#allocation3], 1

</llo_original>
